<compile_context>
chip_gen: v6e
topology: v6e:2x2x1
jax: 0.10.0
libtpu: 0.0.40
codegen_flags: <defaults>
</compile_context>

<pallas_src>
import jax
import jax.numpy as jnp
from jax.experimental import pallas as pl
from jax.experimental.pallas import tpu as pltpu


def _sigmoid_mul_kernel(gate_ref, x_ref, o_ref):
    # gate_ref: (NC, 1)  full gate column, resident in VMEM
    # x_ref:    (tc, HW) feature rows for this grid step's channels
    tc = x_ref.shape[0]
    start = pl.program_id(0) * tc
    if tc % 8 == 0:
        start = pl.multiple_of(start, 8)  # sublane-aligned dynamic slice
    g = gate_ref[pl.ds(start, tc), :].astype(jnp.float32)      # (tc, 1)
    gate = jax.nn.sigmoid(g)                                    # EUP, f32 path
    o_ref[...] = (gate * x_ref[...].astype(jnp.float32)).astype(o_ref.dtype)


def _divisors(n):
    ds = set()
    i = 1
    while i * i <= n:
        if n % i == 0:
            ds.add(i)
            ds.add(n // i)
        i += 1
    return sorted(ds)


def _padded_vmem_bytes(rows, cols, itemsize):
    # VMEM tiles are padded to (8 sublanes, 128 lanes).
    lanes = -(-cols // 128) * 128
    sublanes = -(-rows // 8) * 8
    return sublanes * lanes * itemsize


def _pick_channel_tile(NC, HW, itemsize, vmem_cap_bytes):
    """Largest multiple-of-8 divisor of NC whose double-buffered footprint fits.

    If the whole array fits, use one block -- or two blocks when NC splits
    cleanly, so both v7x TensorCores get a 'parallel' grid step each.
    """
    gate_bytes = 2 * _padded_vmem_bytes(NC, 1, itemsize)  # resident (count 2x, safe)

    def fits(tc):
        # feature in + out, double-buffered, plus resident gate
        return 2 * 2 * _padded_vmem_bytes(tc, HW, itemsize) + gate_bytes <= vmem_cap_bytes

    if fits(NC):
        if NC % 16 == 0:          # NC//2 is still a multiple of 8
            return NC // 2        # grid=(2,): feeds both v7x TCs
        return NC                 # grid=(1,): single full-array block

    best = None
    for d in _divisors(NC):
        if d % 8 == 0 and fits(d) and (best is None or d > best):
            best = d
    if best is not None:
        return best

    # Fallback for pathological shapes: largest multiple-of-8 divisor, else NC.
    mult8 = [d for d in _divisors(NC) if d % 8 == 0]
    return mult8[-1] if mult8 else NC


def sigmoid_mul(x_gate, x_feat, *, channel_tile=None,
                vmem_cap_bytes=20 * 1024 * 1024, donate_features=False):
    """Computes sigmoid(x_gate) * x_feat with NCHW broadcasting.

    x_gate: (N, C, 1, 1);  x_feat: (N, C, H, W);  returns (N, C, H, W).
    """
    N, C, H, W = x_feat.shape
    assert x_gate.shape == (N, C, 1, 1)
    NC = N * C
    HW = H * W

    gate2d = x_gate.reshape(NC, 1)
    feat2d = x_feat.reshape(NC, HW)
    itemsize = jnp.dtype(x_feat.dtype).itemsize

    if channel_tile is None:
        channel_tile = _pick_channel_tile(NC, HW, itemsize, vmem_cap_bytes)
    assert NC % channel_tile == 0, "channel_tile must divide N*C"

    grid = (NC // channel_tile,)

    kwargs = {}
    if donate_features:
        # No bandwidth win, but avoids allocating a second NCHW HBM buffer.
        kwargs["input_output_aliases"] = {1: 0}

    out2d = pl.pallas_call(
        _sigmoid_mul_kernel,
        out_shape=jax.ShapeDtypeStruct((NC, HW), x_feat.dtype),
        grid_spec=pltpu.PrefetchScalarGridSpec(
            num_scalar_prefetch=0,
            grid=grid,
            in_specs=[
                # Full gate column resident in VMEM (constant index map => one DMA).
                pl.BlockSpec((NC, 1), lambda i: (0, 0)),
                pl.BlockSpec((channel_tile, HW), lambda i: (i, 0)),
            ],
            out_specs=pl.BlockSpec((channel_tile, HW), lambda i: (i, 0)),
        ),
        compiler_params=pltpu.CompilerParams(
            dimension_semantics=("parallel",),
            vmem_limit_bytes=32 * 1024 * 1024,  # safe on v5e/v6e/v7x; blocks capped below this
        ),
        **kwargs,
    )(gate2d, feat2d)

    return out2d.reshape(N, C, H, W)


if __name__ == "__main__":
    key = jax.random.PRNGKey(0)
    k1, k2 = jax.random.split(key)

    # Shapes implied by the module's forward pass.
    N, C, H, W = 1, 1632, 7, 7
    x359 = jax.random.normal(k1, (N, C, H, W), dtype=jnp.float32)   # feature map
    x363 = jax.random.normal(k2, (N, C, 1, 1), dtype=jnp.float32)   # SE gate logits

    out = sigmoid_mul(x363, x359)
    out = jax.block_until_ready(out)

    # Reference check in plain JAX (same semantics as torch Sigmoid + mul broadcast).
    ref = jax.nn.sigmoid(x363) * x359
    assert out.shape == (N, C, H, W)
    assert jnp.allclose(out, ref, atol=1e-6, rtol=1e-6)

    print("KERNEL_OK")
</pallas_src>

<mosaic_0001>
module attributes {stable_mosaic.version = 11 : i64} {
  func.func @_sigmoid_mul_kernel(%arg0: i32, %arg1: memref<1632x1xf32, #tpu.memory_space<vmem>>, %arg2: memref<816x49xf32, #tpu.memory_space<vmem>>, %arg3: memref<816x49xf32, #tpu.memory_space<vmem>>) attributes {dimension_semantics = [#tpu.dimension_semantics<parallel>], iteration_bounds = array<i64: 2>, scalar_prefetch = 0 : i64, scratch_operands = 0 : i64, tpu.core_type = #tpu.core_type<tc>, window_params = [{pipeline_mode = #tpu.pipeline_mode<synchronous>, transform_indices = @transform_0, window_bounds = array<i64: 1632, 1>}, {transform_indices = @transform_1, window_bounds = array<i64: 816, 49>}, {transform_indices = @transform_2, window_bounds = array<i64: 816, 49>}]} {
    %c816_i32 = arith.constant 816 : i32
    %0 = arith.muli %arg0, %c816_i32 : i32
    %1 = tpu.assume_multiple %0, 8 : i32
    %2 = arith.index_cast %1 : i32 to index
    %c0 = arith.constant 0 : index
    %3 = vector.load %arg1[%2, %c0] : memref<1632x1xf32, #tpu.memory_space<vmem>>, vector<816x1xf32>
    %4 = arith.negf %3 : vector<816x1xf32>
    %5 = math.exp %4 : vector<816x1xf32>
    %cst = arith.constant 1.000000e+00 : f32
    %6 = vector.broadcast %cst : f32 to vector<816x1xf32>
    %7 = arith.addf %6, %5 : vector<816x1xf32>
    %8 = arith.divf %6, %7 : vector<816x1xf32>
    %c0_0 = arith.constant 0 : index
    %c0_1 = arith.constant 0 : index
    %9 = vector.load %arg2[%c0_0, %c0_1] : memref<816x49xf32, #tpu.memory_space<vmem>>, vector<816x49xf32>
    %10 = vector.broadcast %8 : vector<816x1xf32> to vector<816x49xf32>
    %11 = arith.mulf %10, %9 : vector<816x49xf32>
    %c0_2 = arith.constant 0 : index
    %c0_3 = arith.constant 0 : index
    %12 = vector.load %arg3[%c0_2, %c0_3] : memref<816x49xf32, #tpu.memory_space<vmem>>, vector<816x49xf32>
    tpu.vector_store %arg3[%c0_2, %c0_3], %11 {strides = array<i32>} : memref<816x49xf32, #tpu.memory_space<vmem>>, vector<816x49xf32>,
    return
  }
  func.func @transform_0(%arg0: i32) -> (i32, i32) {
    %c0_i32 = arith.constant 0 : i32
    %c0_i32_0 = arith.constant 0 : i32
    %c0_i32_1 = arith.constant 0 : i32
    return %c0_i32, %c0_i32_0 : i32, i32
  }
  func.func @transform_1(%arg0: i32) -> (i32, i32) {
    %c0_i32 = arith.constant 0 : i32
    %c0_i32_0 = arith.constant 0 : i32
    return %arg0, %c0_i32 : i32, i32
  }
  func.func @transform_2(%arg0: i32) -> (i32, i32) {
    %c0_i32 = arith.constant 0 : i32
    %c0_i32_0 = arith.constant 0 : i32
    return %arg0, %c0_i32 : i32, i32
  }
}

</mosaic_0001>

<llo_original>
// kernel: tpu_custom_call.1
$region0: #{tpu_custom_call.1}
  #allocation0 [shape = 'u32[]', space=smem, size = 0x4, offset = 0x4, fixed_abs, tag = 'smem constant byte address 0x4 - core index']
  #allocation1 [shape = 'u32[144,128]{1,0:T(1,128)}', space=vmem, size = 0x12000, scoped, tag = 'internal scratch']
  %s0 = inlined_call_operand.vmem [shape: f32[1632,1], index: 0, kind: input, shape index: {}]
  %s1 = inlined_call_operand.vmem [shape: f32[1632,49], index: 1, kind: input, shape index: {}]
  %s2 = inlined_call_operand.vmem [shape: f32[1632,49], index: 2, kind: output, shape index: {}]
  %s3 = sld [smem:[#allocation0]]
  $region41: #{tpu_custom_call.1} parent=0
    _
  %s5 = ssub.s32 1, %s3
  %s6 = scalar_select 0, %s5, %s3
  loop: start=0, step=1, limit=4
  $region2: #{tpu_custom_call.1} parent=0 // loop_pre_header
    _
  $region3: #{tpu_custom_call.1} parent=0 // loop_header
    %s8 = sphi 0, %s12
    %p9 = scmp.ge.s32.totalorder %s8, 4
    %s16 = sphi 0, %s16
    %s18 = sphi 0, %s16
    %s19 = sphi 0, %s18
    %s33 = sphi 0, %s19
    %s39 = sphi 0, %s41
    %s42 = sphi 0, %s39
    %s43 = sphi 0, %s42
    %s59 = sphi 0, %s43
    %s65 = sphi 0, %s67
    %s68 = sphi 0, %s65
    %s69 = sphi 0, %s68
    %s85 = sphi 0, %s69
  $region4: #{tpu_custom_call.1} parent=0 // loop_header_branch
    %11 = sbr.rel (%p9) target = $region8
  $region5: #{tpu_custom_call.1} parent=0 // loop_body
    %s13 = ssub.s32 %s8, 1
    %s14 = ssub.s32 %s8, 2
    %s15 = sadd.s32 %s8, 1
    %s17 = sadd.s32 %s16, 1
    %p20 = scmp.eq.s32.totalorder %s8, 1
    %p21 = scmp.ne.s32.totalorder %s16, %s18
    %p22 = scmp.eq.s32.totalorder %s8, 0
    %p23 = por %p21, %p22
    %p24 = scmp.ne.s32.totalorder %s16, %s18
    %p25 = scmp.eq.s32.totalorder %s13, 1
    %p26 = por %p24, %p25
    %p27 = scmp.ne.s32.totalorder %s18, %s19
    %p28 = scmp.eq.s32.totalorder %s13, 0
    %p29 = por %p27, %p28
    %p30 = scmp.ne.s32.totalorder %s18, %s19
    %p31 = scmp.eq.s32.totalorder %s14, 1
    %p32 = por %p30, %p31
    %p34 = scmp.ne.s32.totalorder %s19, %s33
    %p35 = scmp.eq.s32.totalorder %s14, 0
    %p36 = por %p34, %p35
    %s37 = ssub.s32 %s8, %s15
    %p38 = scmp.eq.s32.totalorder %s37, 0
    %s40 = sadd.s32 %s39, 1
    %s41 = scalar_select %p38, %s39, %s40
    %p44 = pneg %p38
    %p45 = scmp.eq.s32.totalorder %s8, 1
    %p46 = por %p44, %p45
    %p47 = scmp.ne.s32.totalorder %s39, %s42
    %p48 = scmp.eq.s32.totalorder %s8, 0
    %p49 = por %p47, %p48
    %p50 = scmp.ne.s32.totalorder %s39, %s42
    %p51 = scmp.eq.s32.totalorder %s13, 1
    %p52 = por %p50, %p51
    %p53 = scmp.ne.s32.totalorder %s42, %s43
    %p54 = scmp.eq.s32.totalorder %s13, 0
    %p55 = por %p53, %p54
    %p56 = scmp.ne.s32.totalorder %s42, %s43
    %p57 = scmp.eq.s32.totalorder %s14, 1
    %p58 = por %p56, %p57
    %p60 = scmp.ne.s32.totalorder %s43, %s59
    %p61 = scmp.eq.s32.totalorder %s14, 0
    %p62 = por %p60, %p61
    %s63 = ssub.s32 %s8, %s15
    %p64 = scmp.eq.s32.totalorder %s63, 0
    %s66 = sadd.s32 %s65, 1
    %s67 = scalar_select %p64, %s65, %s66
    %p70 = pneg %p64
    %p71 = scmp.eq.s32.totalorder %s8, 1
    %p72 = por %p70, %p71
    %p73 = scmp.ne.s32.totalorder %s65, %s68
    %p74 = scmp.eq.s32.totalorder %s8, 0
    %p75 = por %p73, %p74
    %p76 = scmp.ne.s32.totalorder %s65, %s68
    %p77 = scmp.eq.s32.totalorder %s13, 1
    %p78 = por %p76, %p77
    %p79 = scmp.ne.s32.totalorder %s68, %s69
    %p80 = scmp.eq.s32.totalorder %s13, 0
    %p81 = por %p79, %p80
    %p82 = scmp.ne.s32.totalorder %s68, %s69
    %p83 = scmp.eq.s32.totalorder %s14, 1
    %p84 = por %p82, %p83
    %p86 = scmp.ne.s32.totalorder %s69, %s85
    %p87 = scmp.eq.s32.totalorder %s14, 0
    %p88 = por %p86, %p87
    %p89 = scmp.le.s32.totalorder 1, %s8
    %p90 = scmp.lt.s32.totalorder %s8, 3
    %p91 = pnand %p89, %p90
    %p92 = pneg %p91
    // Predicated region
    $region9: #{tpu_custom_call.1} parent=5 // pred_check
      _
    $region10: #{tpu_custom_call.1} parent=5 // pred_check_branch
      %94 = sbr.rel (%p91) target = $region12
    $region11: #{tpu_custom_call.1} parent=5 // pred_region
      %s95 = ssub.s32 %s8, 1
      // Predicated region
      $region13: #{tpu_custom_call.1} parent=11 // pred_check
        %p96 = pneg %p29
      $region14: #{tpu_custom_call.1} parent=11 // pred_check_branch
        %98 = sbr.rel (%p96) target = $region16
      $region15: #{tpu_custom_call.1} parent=11 // pred_region
        _
      $region16: #{tpu_custom_call.1} parent=11 // pred_fallthru
        _
    $region12: #{tpu_custom_call.1} parent=5 // pred_fallthru
      _
    %p99 = scmp.lt.s32.totalorder %s8, 2
    // Predicated region
    $region17: #{tpu_custom_call.1} parent=5 // pred_check
      %p100 = pneg %p99
    $region18: #{tpu_custom_call.1} parent=5 // pred_check_branch
      %102 = sbr.rel (%p100) target = $region20
    $region19: #{tpu_custom_call.1} parent=5 // pred_region
      // Predicated region
      $region21: #{tpu_custom_call.1} parent=19 // pred_check
        %p103 = pneg %p49
      $region22: #{tpu_custom_call.1} parent=19 // pred_check_branch
        %105 = sbr.rel (%p103) target = $region24
      $region23: #{tpu_custom_call.1} parent=19 // pred_region
        %s106 = smul.u32 102, %s8
        %p107 = scmp.lt.s32.totalorder %s106, 203
        %s108 = scalar_select %p107, %s106, 203
        %s109 = smul.addr %s108, 8
        %s110 = scalar_lea.vmem %s1, %s109
        %s111 = smul.u32 102, %s8
      $region24: #{tpu_custom_call.1} parent=19 // pred_fallthru
        _
    $region20: #{tpu_custom_call.1} parent=5 // pred_fallthru
      _
    %p112 = scmp.le.s32.totalorder 1, %s8
    %p113 = scmp.lt.s32.totalorder %s8, 3
    %p114 = pnand %p112, %p113
    %p115 = pneg %p114
    // Predicated region
    $region25: #{tpu_custom_call.1} parent=5 // pred_check
      _
    $region26: #{tpu_custom_call.1} parent=5 // pred_check_branch
      %117 = sbr.rel (%p114) target = $region28
    $region27: #{tpu_custom_call.1} parent=5 // pred_region
      %s118 = ssub.s32 %s8, 1
      %p119 = pneg %p29
      %p120 = pneg %p26
      %s121 = smul.u32 102, %s13
      %p122 = scmp.lt.s32.totalorder %s121, 203
      %s123 = scalar_select %p122, %s121, 203
      %s124 = smul.addr %s123, 8
      %s125 = scalar_lea.vmem %s1, %s124
      %p126 = pneg %p55
      %p127 = pneg %p52
      %p128 = pneg %p81
      %p129 = pneg %p78
      %s130 = smul.u32 102, %s13
      %p131 = scmp.lt.s32.totalorder %s130, 203
      %s132 = scalar_select %p131, %s130, 203
      %s133 = smul.addr %s132, 8
      %s134 = scalar_lea.vmem %s2, %s133
      %s135 = smul.u32 102, %s13
      %p136 = scmp.lt.s32.totalorder %s135, 203
      %s137 = scalar_select %p136, %s135, 203
      %s138 = smul.addr %s137, 8
      %s139 = scalar_lea.vmem %s1, %s138
      %s140 = smul.u32 102, %s13
      %s141 = smul.u32 102, %s13
      %p142 = scmp.lt.s32.totalorder %s141, 203
      %s143 = scalar_select %p142, %s141, 203
      %s144 = smul.addr %s143, 8
      %s145 = scalar_lea.vmem %s2, %s144
      %s146 = smul.u32 102, %s13
      %s147 = smul.u32 %s13, 816
      %s148 = scalar_lea.vmem %s0, %s147
      %v149 = vld [vmem:[%s148] sm:$0xff]
      %v150 = vld [vmem:[%s148 + $0x8] sm:$0xff]
      %v151 = vld [vmem:[%s148 + $0x10] sm:$0xff]
      %v152 = vld [vmem:[%s148 + $0x18] sm:$0xff]
      %v153 = vld [vmem:[%s148 + $0x20] sm:$0xff]
      %v154 = vld [vmem:[%s148 + $0x28] sm:$0xff]
      %v155 = vld [vmem:[%s148 + $0x30] sm:$0xff]
      %v156 = vld [vmem:[%s148 + $0x38] sm:$0xff]
      %v157 = vld [vmem:[%s148 + $0x40] sm:$0xff]
      %v158 = vld [vmem:[%s148 + $0x48] sm:$0xff]
      %v159 = vld [vmem:[%s148 + $0x50] sm:$0xff]
      %v160 = vld [vmem:[%s148 + $0x58] sm:$0xff]
      %v161 = vld [vmem:[%s148 + $0x60] sm:$0xff]
      %v162 = vld [vmem:[%s148 + $0x68] sm:$0xff]
      %v163 = vld [vmem:[%s148 + $0x70] sm:$0xff]
      %v164 = vld [vmem:[%s148 + $0x78] sm:$0xff]
      %v165 = vld [vmem:[%s148 + $0x80] sm:$0xff]
      %v166 = vld [vmem:[%s148 + $0x88] sm:$0xff]
      %v167 = vld [vmem:[%s148 + $0x90] sm:$0xff]
      %v168 = vld [vmem:[%s148 + $0x98] sm:$0xff]
      %v169 = vld [vmem:[%s148 + $0xa0] sm:$0xff]
      %v170 = vld [vmem:[%s148 + $0xa8] sm:$0xff]
      %v171 = vld [vmem:[%s148 + $0xb0] sm:$0xff]
      %v172 = vld [vmem:[%s148 + $0xb8] sm:$0xff]
      %v173 = vld [vmem:[%s148 + $0xc0] sm:$0xff]
      %v174 = vld [vmem:[%s148 + $0xc8] sm:$0xff]
      %v175 = vld [vmem:[%s148 + $0xd0] sm:$0xff]
      %v176 = vld [vmem:[%s148 + $0xd8] sm:$0xff]
      %v177 = vld [vmem:[%s148 + $0xe0] sm:$0xff]
      %v178 = vld [vmem:[%s148 + $0xe8] sm:$0xff]
      %v179 = vld [vmem:[%s148 + $0xf0] sm:$0xff]
      %v180 = vld [vmem:[%s148 + $0xf8] sm:$0xff]
      %v181 = vld [vmem:[%s148 + $0x100] sm:$0xff]
      %v182 = vld [vmem:[%s148 + $0x108] sm:$0xff]
      %v183 = vld [vmem:[%s148 + $0x110] sm:$0xff]
      %v184 = vld [vmem:[%s148 + $0x118] sm:$0xff]
      %v185 = vld [vmem:[%s148 + $0x120] sm:$0xff]
      %v186 = vld [vmem:[%s148 + $0x128] sm:$0xff]
      %v187 = vld [vmem:[%s148 + $0x130] sm:$0xff]
      %v188 = vld [vmem:[%s148 + $0x138] sm:$0xff]
      %v189 = vld [vmem:[%s148 + $0x140] sm:$0xff]
      %v190 = vld [vmem:[%s148 + $0x148] sm:$0xff]
      %v191 = vld [vmem:[%s148 + $0x150] sm:$0xff]
      %v192 = vld [vmem:[%s148 + $0x158] sm:$0xff]
      %v193 = vld [vmem:[%s148 + $0x160] sm:$0xff]
      %v194 = vld [vmem:[%s148 + $0x168] sm:$0xff]
      %v195 = vld [vmem:[%s148 + $0x170] sm:$0xff]
      %v196 = vld [vmem:[%s148 + $0x178] sm:$0xff]
      %v197 = vld [vmem:[%s148 + $0x180] sm:$0xff]
      %v198 = vld [vmem:[%s148 + $0x188] sm:$0xff]
      %v199 = vld [vmem:[%s148 + $0x190] sm:$0xff]
      %v200 = vld [vmem:[%s148 + $0x198] sm:$0xff]
      %v201 = vld [vmem:[%s148 + $0x1a0] sm:$0xff]
      %v202 = vld [vmem:[%s148 + $0x1a8] sm:$0xff]
      %v203 = vld [vmem:[%s148 + $0x1b0] sm:$0xff]
      %v204 = vld [vmem:[%s148 + $0x1b8] sm:$0xff]
      %v205 = vld [vmem:[%s148 + $0x1c0] sm:$0xff]
      %v206 = vld [vmem:[%s148 + $0x1c8] sm:$0xff]
      %v207 = vld [vmem:[%s148 + $0x1d0] sm:$0xff]
      %v208 = vld [vmem:[%s148 + $0x1d8] sm:$0xff]
      %v209 = vld [vmem:[%s148 + $0x1e0] sm:$0xff]
      %v210 = vld [vmem:[%s148 + $0x1e8] sm:$0xff]
      %v211 = vld [vmem:[%s148 + $0x1f0] sm:$0xff]
      %v212 = vld [vmem:[%s148 + $0x1f8] sm:$0xff]
      %v213 = vld [vmem:[%s148 + $0x200] sm:$0xff]
      %v214 = vld [vmem:[%s148 + $0x208] sm:$0xff]
      %v215 = vld [vmem:[%s148 + $0x210] sm:$0xff]
      %v216 = vld [vmem:[%s148 + $0x218] sm:$0xff]
      %v217 = vld [vmem:[%s148 + $0x220] sm:$0xff]
      %v218 = vld [vmem:[%s148 + $0x228] sm:$0xff]
      %v219 = vld [vmem:[%s148 + $0x230] sm:$0xff]
      %v220 = vld [vmem:[%s148 + $0x238] sm:$0xff]
      %v221 = vld [vmem:[%s148 + $0x240] sm:$0xff]
      %v222 = vld [vmem:[%s148 + $0x248] sm:$0xff]
      %v223 = vld [vmem:[%s148 + $0x250] sm:$0xff]
      %v224 = vld [vmem:[%s148 + $0x258] sm:$0xff]
      %v225 = vld [vmem:[%s148 + $0x260] sm:$0xff]
      %v226 = vld [vmem:[%s148 + $0x268] sm:$0xff]
      %v227 = vld [vmem:[%s148 + $0x270] sm:$0xff]
      %v228 = vld [vmem:[%s148 + $0x278] sm:$0xff]
      %v229 = vld [vmem:[%s148 + $0x280] sm:$0xff]
      %v230 = vld [vmem:[%s148 + $0x288] sm:$0xff]
      %v231 = vld [vmem:[%s148 + $0x290] sm:$0xff]
      %v232 = vld [vmem:[%s148 + $0x298] sm:$0xff]
      %v233 = vld [vmem:[%s148 + $0x2a0] sm:$0xff]
      %v234 = vld [vmem:[%s148 + $0x2a8] sm:$0xff]
      %v235 = vld [vmem:[%s148 + $0x2b0] sm:$0xff]
      %v236 = vld [vmem:[%s148 + $0x2b8] sm:$0xff]
      %v237 = vld [vmem:[%s148 + $0x2c0] sm:$0xff]
      %v238 = vld [vmem:[%s148 + $0x2c8] sm:$0xff]
      %v239 = vld [vmem:[%s148 + $0x2d0] sm:$0xff]
      %v240 = vld [vmem:[%s148 + $0x2d8] sm:$0xff]
      %v241 = vld [vmem:[%s148 + $0x2e0] sm:$0xff]
      %v242 = vld [vmem:[%s148 + $0x2e8] sm:$0xff]
      %v243 = vld [vmem:[%s148 + $0x2f0] sm:$0xff]
      %v244 = vld [vmem:[%s148 + $0x2f8] sm:$0xff]
      %v245 = vld [vmem:[%s148 + $0x300] sm:$0xff]
      %v246 = vld [vmem:[%s148 + $0x308] sm:$0xff]
      %v247 = vld [vmem:[%s148 + $0x310] sm:$0xff]
      %v248 = vld [vmem:[%s148 + $0x318] sm:$0xff]
      %v249 = vld [vmem:[%s148 + $0x320] sm:$0xff]
      %v250 = vld [vmem:[%s148 + $0x328] sm:$0xff]
      %v251 = vxor.u32 %v149, 2147483648
      %v252 = vxor.u32 %v150, 2147483648
      %v253 = vxor.u32 %v151, 2147483648
      %v254 = vxor.u32 %v152, 2147483648
      %v255 = vxor.u32 %v153, 2147483648
      %v256 = vxor.u32 %v154, 2147483648
      %v257 = vxor.u32 %v155, 2147483648
      %v258 = vxor.u32 %v156, 2147483648
      %v259 = vxor.u32 %v157, 2147483648
      %v260 = vxor.u32 %v158, 2147483648
      %v261 = vxor.u32 %v159, 2147483648
      %v262 = vxor.u32 %v160, 2147483648
      %v263 = vxor.u32 %v161, 2147483648
      %v264 = vxor.u32 %v162, 2147483648
      %v265 = vxor.u32 %v163, 2147483648
      %v266 = vxor.u32 %v164, 2147483648
      %v267 = vxor.u32 %v165, 2147483648
      %v268 = vxor.u32 %v166, 2147483648
      %v269 = vxor.u32 %v167, 2147483648
      %v270 = vxor.u32 %v168, 2147483648
      %v271 = vxor.u32 %v169, 2147483648
      %v272 = vxor.u32 %v170, 2147483648
      %v273 = vxor.u32 %v171, 2147483648
      %v274 = vxor.u32 %v172, 2147483648
      %v275 = vxor.u32 %v173, 2147483648
      %v276 = vxor.u32 %v174, 2147483648
      %v277 = vxor.u32 %v175, 2147483648
      %v278 = vxor.u32 %v176, 2147483648
      %v279 = vxor.u32 %v177, 2147483648
      %v280 = vxor.u32 %v178, 2147483648
      %v281 = vxor.u32 %v179, 2147483648
      %v282 = vxor.u32 %v180, 2147483648
      %v283 = vxor.u32 %v181, 2147483648
      %v284 = vxor.u32 %v182, 2147483648
      %v285 = vxor.u32 %v183, 2147483648
      %v286 = vxor.u32 %v184, 2147483648
      %v287 = vxor.u32 %v185, 2147483648
      %v288 = vxor.u32 %v186, 2147483648
      %v289 = vxor.u32 %v187, 2147483648
      %v290 = vxor.u32 %v188, 2147483648
      %v291 = vxor.u32 %v189, 2147483648
      %v292 = vxor.u32 %v190, 2147483648
      %v293 = vxor.u32 %v191, 2147483648
      %v294 = vxor.u32 %v192, 2147483648
      %v295 = vxor.u32 %v193, 2147483648
      %v296 = vxor.u32 %v194, 2147483648
      %v297 = vxor.u32 %v195, 2147483648
      %v298 = vxor.u32 %v196, 2147483648
      %v299 = vxor.u32 %v197, 2147483648
      %v300 = vxor.u32 %v198, 2147483648
      %v301 = vxor.u32 %v199, 2147483648
      %v302 = vxor.u32 %v200, 2147483648
      %v303 = vxor.u32 %v201, 2147483648
      %v304 = vxor.u32 %v202, 2147483648
      %v305 = vxor.u32 %v203, 2147483648
      %v306 = vxor.u32 %v204, 2147483648
      %v307 = vxor.u32 %v205, 2147483648
      %v308 = vxor.u32 %v206, 2147483648
      %v309 = vxor.u32 %v207, 2147483648
      %v310 = vxor.u32 %v208, 2147483648
      %v311 = vxor.u32 %v209, 2147483648
      %v312 = vxor.u32 %v210, 2147483648
      %v313 = vxor.u32 %v211, 2147483648
      %v314 = vxor.u32 %v212, 2147483648
      %v315 = vxor.u32 %v213, 2147483648
      %v316 = vxor.u32 %v214, 2147483648
      %v317 = vxor.u32 %v215, 2147483648
      %v318 = vxor.u32 %v216, 2147483648
      %v319 = vxor.u32 %v217, 2147483648
      %v320 = vxor.u32 %v218, 2147483648
      %v321 = vxor.u32 %v219, 2147483648
      %v322 = vxor.u32 %v220, 2147483648
      %v323 = vxor.u32 %v221, 2147483648
      %v324 = vxor.u32 %v222, 2147483648
      %v325 = vxor.u32 %v223, 2147483648
      %v326 = vxor.u32 %v224, 2147483648
      %v327 = vxor.u32 %v225, 2147483648
      %v328 = vxor.u32 %v226, 2147483648
      %v329 = vxor.u32 %v227, 2147483648
      %v330 = vxor.u32 %v228, 2147483648
      %v331 = vxor.u32 %v229, 2147483648
      %v332 = vxor.u32 %v230, 2147483648
      %v333 = vxor.u32 %v231, 2147483648
      %v334 = vxor.u32 %v232, 2147483648
      %v335 = vxor.u32 %v233, 2147483648
      %v336 = vxor.u32 %v234, 2147483648
      %v337 = vxor.u32 %v235, 2147483648
      %v338 = vxor.u32 %v236, 2147483648
      %v339 = vxor.u32 %v237, 2147483648
      %v340 = vxor.u32 %v238, 2147483648
      %v341 = vxor.u32 %v239, 2147483648
      %v342 = vxor.u32 %v240, 2147483648
      %v343 = vxor.u32 %v241, 2147483648
      %v344 = vxor.u32 %v242, 2147483648
      %v345 = vxor.u32 %v243, 2147483648
      %v346 = vxor.u32 %v244, 2147483648
      %v347 = vxor.u32 %v245, 2147483648
      %v348 = vxor.u32 %v246, 2147483648
      %v349 = vxor.u32 %v247, 2147483648
      %v350 = vxor.u32 %v248, 2147483648
      %v351 = vxor.u32 %v249, 2147483648
      %v352 = vxor.u32 %v250, 2147483648
      %v353 = vmul.f32 %v251, 1.442695
      %v354 = vpow.pop %v353
      %v355 = vmul.f32 %v252, 1.442695
      %v356 = vpow.pop %v355
      %v357 = vmul.f32 %v253, 1.442695
      %v358 = vpow.pop %v357
      %v359 = vmul.f32 %v254, 1.442695
      %v360 = vpow.pop %v359
      %v361 = vmul.f32 %v255, 1.442695
      %v362 = vpow.pop %v361
      %v363 = vmul.f32 %v256, 1.442695
      %v364 = vpow.pop %v363
      %v365 = vmul.f32 %v257, 1.442695
      %v366 = vpow.pop %v365
      %v367 = vmul.f32 %v258, 1.442695
      %v368 = vpow.pop %v367
      %v369 = vmul.f32 %v259, 1.442695
      %v370 = vpow.pop %v369
      %v371 = vmul.f32 %v260, 1.442695
      %v372 = vpow.pop %v371
      %v373 = vmul.f32 %v261, 1.442695
      %v374 = vpow.pop %v373
      %v375 = vmul.f32 %v262, 1.442695
      %v376 = vpow.pop %v375
      %v377 = vmul.f32 %v263, 1.442695
      %v378 = vpow.pop %v377
      %v379 = vmul.f32 %v264, 1.442695
      %v380 = vpow.pop %v379
      %v381 = vmul.f32 %v265, 1.442695
      %v382 = vpow.pop %v381
      %v383 = vmul.f32 %v266, 1.442695
      %v384 = vpow.pop %v383
      %v385 = vmul.f32 %v267, 1.442695
      %v386 = vpow.pop %v385
      %v387 = vmul.f32 %v268, 1.442695
      %v388 = vpow.pop %v387
      %v389 = vmul.f32 %v269, 1.442695
      %v390 = vpow.pop %v389
      %v391 = vmul.f32 %v270, 1.442695
      %v392 = vpow.pop %v391
      %v393 = vmul.f32 %v271, 1.442695
      %v394 = vpow.pop %v393
      %v395 = vmul.f32 %v272, 1.442695
      %v396 = vpow.pop %v395
      %v397 = vmul.f32 %v273, 1.442695
      %v398 = vpow.pop %v397
      %v399 = vmul.f32 %v274, 1.442695
      %v400 = vpow.pop %v399
      %v401 = vmul.f32 %v275, 1.442695
      %v402 = vpow.pop %v401
      %v403 = vmul.f32 %v276, 1.442695
      %v404 = vpow.pop %v403
      %v405 = vmul.f32 %v277, 1.442695
      %v406 = vpow.pop %v405
      %v407 = vmul.f32 %v278, 1.442695
      %v408 = vpow.pop %v407
      %v409 = vmul.f32 %v279, 1.442695
      %v410 = vpow.pop %v409
      %v411 = vmul.f32 %v280, 1.442695
      %v412 = vpow.pop %v411
      %v413 = vmul.f32 %v281, 1.442695
      %v414 = vpow.pop %v413
      %v415 = vmul.f32 %v282, 1.442695
      %v416 = vpow.pop %v415
      %v417 = vmul.f32 %v283, 1.442695
      %v418 = vpow.pop %v417
      %v419 = vmul.f32 %v284, 1.442695
      %v420 = vpow.pop %v419
      %v421 = vmul.f32 %v285, 1.442695
      %v422 = vpow.pop %v421
      %v423 = vmul.f32 %v286, 1.442695
      %v424 = vpow.pop %v423
      %v425 = vmul.f32 %v287, 1.442695
      %v426 = vpow.pop %v425
      %v427 = vmul.f32 %v288, 1.442695
      %v428 = vpow.pop %v427
      %v429 = vmul.f32 %v289, 1.442695
      %v430 = vpow.pop %v429
      %v431 = vmul.f32 %v290, 1.442695
      %v432 = vpow.pop %v431
      %v433 = vmul.f32 %v291, 1.442695
      %v434 = vpow.pop %v433
      %v435 = vmul.f32 %v292, 1.442695
      %v436 = vpow.pop %v435
      %v437 = vmul.f32 %v293, 1.442695
      %v438 = vpow.pop %v437
      %v439 = vmul.f32 %v294, 1.442695
      %v440 = vpow.pop %v439
      %v441 = vmul.f32 %v295, 1.442695
      %v442 = vpow.pop %v441
      %v443 = vmul.f32 %v296, 1.442695
      %v444 = vpow.pop %v443
      %v445 = vmul.f32 %v297, 1.442695
      %v446 = vpow.pop %v445
      %v447 = vmul.f32 %v298, 1.442695
      %v448 = vpow.pop %v447
      %v449 = vmul.f32 %v299, 1.442695
      %v450 = vpow.pop %v449
      %v451 = vmul.f32 %v300, 1.442695
      %v452 = vpow.pop %v451
      %v453 = vmul.f32 %v301, 1.442695
      %v454 = vpow.pop %v453
      %v455 = vmul.f32 %v302, 1.442695
      %v456 = vpow.pop %v455
      %v457 = vmul.f32 %v303, 1.442695
      %v458 = vpow.pop %v457
      %v459 = vmul.f32 %v304, 1.442695
      %v460 = vpow.pop %v459
      %v461 = vmul.f32 %v305, 1.442695
      %v462 = vpow.pop %v461
      %v463 = vmul.f32 %v306, 1.442695
      %v464 = vpow.pop %v463
      %v465 = vmul.f32 %v307, 1.442695
      %v466 = vpow.pop %v465
      %v467 = vmul.f32 %v308, 1.442695
      %v468 = vpow.pop %v467
      %v469 = vmul.f32 %v309, 1.442695
      %v470 = vpow.pop %v469
      %v471 = vmul.f32 %v310, 1.442695
      %v472 = vpow.pop %v471
      %v473 = vmul.f32 %v311, 1.442695
      %v474 = vpow.pop %v473
      %v475 = vmul.f32 %v312, 1.442695
      %v476 = vpow.pop %v475
      %v477 = vmul.f32 %v313, 1.442695
      %v478 = vpow.pop %v477
      %v479 = vmul.f32 %v314, 1.442695
      %v480 = vpow.pop %v479
      %v481 = vmul.f32 %v315, 1.442695
      %v482 = vpow.pop %v481
      %v483 = vmul.f32 %v316, 1.442695
      %v484 = vpow.pop %v483
      %v485 = vmul.f32 %v317, 1.442695
      %v486 = vpow.pop %v485
      %v487 = vmul.f32 %v318, 1.442695
      %v488 = vpow.pop %v487
      %v489 = vmul.f32 %v319, 1.442695
      %v490 = vpow.pop %v489
      %v491 = vmul.f32 %v320, 1.442695
      %v492 = vpow.pop %v491
      %v493 = vmul.f32 %v321, 1.442695
      %v494 = vpow.pop %v493
      %v495 = vmul.f32 %v322, 1.442695
      %v496 = vpow.pop %v495
      %v497 = vmul.f32 %v323, 1.442695
      %v498 = vpow.pop %v497
      %v499 = vmul.f32 %v324, 1.442695
      %v500 = vpow.pop %v499
      %v501 = vmul.f32 %v325, 1.442695
      %v502 = vpow.pop %v501
      %v503 = vmul.f32 %v326, 1.442695
      %v504 = vpow.pop %v503
      %v505 = vmul.f32 %v327, 1.442695
      %v506 = vpow.pop %v505
      %v507 = vmul.f32 %v328, 1.442695
      %v508 = vpow.pop %v507
      %v509 = vmul.f32 %v329, 1.442695
      %v510 = vpow.pop %v509
      %v511 = vmul.f32 %v330, 1.442695
      %v512 = vpow.pop %v511
      %v513 = vmul.f32 %v331, 1.442695
      %v514 = vpow.pop %v513
      %v515 = vmul.f32 %v332, 1.442695
      %v516 = vpow.pop %v515
      %v517 = vmul.f32 %v333, 1.442695
      %v518 = vpow.pop %v517
      %v519 = vmul.f32 %v334, 1.442695
      %v520 = vpow.pop %v519
      %v521 = vmul.f32 %v335, 1.442695
      %v522 = vpow.pop %v521
      %v523 = vmul.f32 %v336, 1.442695
      %v524 = vpow.pop %v523
      %v525 = vmul.f32 %v337, 1.442695
      %v526 = vpow.pop %v525
      %v527 = vmul.f32 %v338, 1.442695
      %v528 = vpow.pop %v527
      %v529 = vmul.f32 %v339, 1.442695
      %v530 = vpow.pop %v529
      %v531 = vmul.f32 %v340, 1.442695
      %v532 = vpow.pop %v531
      %v533 = vmul.f32 %v341, 1.442695
      %v534 = vpow.pop %v533
      %v535 = vmul.f32 %v342, 1.442695
      %v536 = vpow.pop %v535
      %v537 = vmul.f32 %v343, 1.442695
      %v538 = vpow.pop %v537
      %v539 = vmul.f32 %v344, 1.442695
      %v540 = vpow.pop %v539
      %v541 = vmul.f32 %v345, 1.442695
      %v542 = vpow.pop %v541
      %v543 = vmul.f32 %v346, 1.442695
      %v544 = vpow.pop %v543
      %v545 = vmul.f32 %v347, 1.442695
      %v546 = vpow.pop %v545
      %v547 = vmul.f32 %v348, 1.442695
      %v548 = vpow.pop %v547
      %v549 = vmul.f32 %v349, 1.442695
      %v550 = vpow.pop %v549
      %v551 = vmul.f32 %v350, 1.442695
      %v552 = vpow.pop %v551
      %v553 = vmul.f32 %v351, 1.442695
      %v554 = vpow.pop %v553
      %v555 = vmul.f32 %v352, 1.442695
      %v556 = vpow.pop %v555
      %v557 = vadd.f32 %v354, 1.0
      %v558 = vadd.f32 %v356, 1.0
      %v559 = vadd.f32 %v358, 1.0
      %v560 = vadd.f32 %v360, 1.0
      %v561 = vadd.f32 %v362, 1.0
      %v562 = vadd.f32 %v364, 1.0
      %v563 = vadd.f32 %v366, 1.0
      %v564 = vadd.f32 %v368, 1.0
      %v565 = vadd.f32 %v370, 1.0
      %v566 = vadd.f32 %v372, 1.0
      %v567 = vadd.f32 %v374, 1.0
      %v568 = vadd.f32 %v376, 1.0
      %v569 = vadd.f32 %v378, 1.0
      %v570 = vadd.f32 %v380, 1.0
      %v571 = vadd.f32 %v382, 1.0
      %v572 = vadd.f32 %v384, 1.0
      %v573 = vadd.f32 %v386, 1.0
      %v574 = vadd.f32 %v388, 1.0
      %v575 = vadd.f32 %v390, 1.0
      %v576 = vadd.f32 %v392, 1.0
      %v577 = vadd.f32 %v394, 1.0
      %v578 = vadd.f32 %v396, 1.0
      %v579 = vadd.f32 %v398, 1.0
      %v580 = vadd.f32 %v400, 1.0
      %v581 = vadd.f32 %v402, 1.0
      %v582 = vadd.f32 %v404, 1.0
      %v583 = vadd.f32 %v406, 1.0
      %v584 = vadd.f32 %v408, 1.0
      %v585 = vadd.f32 %v410, 1.0
      %v586 = vadd.f32 %v412, 1.0
      %v587 = vadd.f32 %v414, 1.0
      %v588 = vadd.f32 %v416, 1.0
      %v589 = vadd.f32 %v418, 1.0
      %v590 = vadd.f32 %v420, 1.0
      %v591 = vadd.f32 %v422, 1.0
      %v592 = vadd.f32 %v424, 1.0
      %v593 = vadd.f32 %v426, 1.0
      %v594 = vadd.f32 %v428, 1.0
      %v595 = vadd.f32 %v430, 1.0
      %v596 = vadd.f32 %v432, 1.0
      %v597 = vadd.f32 %v434, 1.0
      %v598 = vadd.f32 %v436, 1.0
      %v599 = vadd.f32 %v438, 1.0
      %v600 = vadd.f32 %v440, 1.0
      %v601 = vadd.f32 %v442, 1.0
      %v602 = vadd.f32 %v444, 1.0
      %v603 = vadd.f32 %v446, 1.0
      %v604 = vadd.f32 %v448, 1.0
      %v605 = vadd.f32 %v450, 1.0
      %v606 = vadd.f32 %v452, 1.0
      %v607 = vadd.f32 %v454, 1.0
      %v608 = vadd.f32 %v456, 1.0
      %v609 = vadd.f32 %v458, 1.0
      %v610 = vadd.f32 %v460, 1.0
      %v611 = vadd.f32 %v462, 1.0
      %v612 = vadd.f32 %v464, 1.0
      %v613 = vadd.f32 %v466, 1.0
      %v614 = vadd.f32 %v468, 1.0
      %v615 = vadd.f32 %v470, 1.0
      %v616 = vadd.f32 %v472, 1.0
      %v617 = vadd.f32 %v474, 1.0
      %v618 = vadd.f32 %v476, 1.0
      %v619 = vadd.f32 %v478, 1.0
      %v620 = vadd.f32 %v480, 1.0
      %v621 = vadd.f32 %v482, 1.0
      %v622 = vadd.f32 %v484, 1.0
      %v623 = vadd.f32 %v486, 1.0
      %v624 = vadd.f32 %v488, 1.0
      %v625 = vadd.f32 %v490, 1.0
      %v626 = vadd.f32 %v492, 1.0
      %v627 = vadd.f32 %v494, 1.0
      %v628 = vadd.f32 %v496, 1.0
      %v629 = vadd.f32 %v498, 1.0
      %v630 = vadd.f32 %v500, 1.0
      %v631 = vadd.f32 %v502, 1.0
      %v632 = vadd.f32 %v504, 1.0
      %v633 = vadd.f32 %v506, 1.0
      %v634 = vadd.f32 %v508, 1.0
      %v635 = vadd.f32 %v510, 1.0
      %v636 = vadd.f32 %v512, 1.0
      %v637 = vadd.f32 %v514, 1.0
      %v638 = vadd.f32 %v516, 1.0
      %v639 = vadd.f32 %v518, 1.0
      %v640 = vadd.f32 %v520, 1.0
      %v641 = vadd.f32 %v522, 1.0
      %v642 = vadd.f32 %v524, 1.0
      %v643 = vadd.f32 %v526, 1.0
      %v644 = vadd.f32 %v528, 1.0
      %v645 = vadd.f32 %v530, 1.0
      %v646 = vadd.f32 %v532, 1.0
      %v647 = vadd.f32 %v534, 1.0
      %v648 = vadd.f32 %v536, 1.0
      %v649 = vadd.f32 %v538, 1.0
      %v650 = vadd.f32 %v540, 1.0
      %v651 = vadd.f32 %v542, 1.0
      %v652 = vadd.f32 %v544, 1.0
      %v653 = vadd.f32 %v546, 1.0
      %v654 = vadd.f32 %v548, 1.0
      %v655 = vadd.f32 %v550, 1.0
      %v656 = vadd.f32 %v552, 1.0
      %v657 = vadd.f32 %v554, 1.0
      %v658 = vadd.f32 %v556, 1.0
      %v659 = vrcp.pop %v557
      %v660 = vmul.f32 1.0, %v659
      %v661 = vrcp.pop %v558
      %v662 = vmul.f32 1.0, %v661
      %v663 = vrcp.pop %v559
      %v664 = vmul.f32 1.0, %v663
      %v665 = vrcp.pop %v560
      %v666 = vmul.f32 1.0, %v665
      %v667 = vrcp.pop %v561
      %v668 = vmul.f32 1.0, %v667
      %v669 = vrcp.pop %v562
      %v670 = vmul.f32 1.0, %v669
      %v671 = vrcp.pop %v563
      %v672 = vmul.f32 1.0, %v671
      %v673 = vrcp.pop %v564
      %v674 = vmul.f32 1.0, %v673
      %v675 = vrcp.pop %v565
      %v676 = vmul.f32 1.0, %v675
      %v677 = vrcp.pop %v566
      %v678 = vmul.f32 1.0, %v677
      %v679 = vrcp.pop %v567
      %v680 = vmul.f32 1.0, %v679
      %v681 = vrcp.pop %v568
      %v682 = vmul.f32 1.0, %v681
      %v683 = vrcp.pop %v569
      %v684 = vmul.f32 1.0, %v683
      %v685 = vrcp.pop %v570
      %v686 = vmul.f32 1.0, %v685
      %v687 = vrcp.pop %v571
      %v688 = vmul.f32 1.0, %v687
      %v689 = vrcp.pop %v572
      %v690 = vmul.f32 1.0, %v689
      %v691 = vrcp.pop %v573
      %v692 = vmul.f32 1.0, %v691
      %v693 = vrcp.pop %v574
      %v694 = vmul.f32 1.0, %v693
      %v695 = vrcp.pop %v575
      %v696 = vmul.f32 1.0, %v695
      %v697 = vrcp.pop %v576
      %v698 = vmul.f32 1.0, %v697
      %v699 = vrcp.pop %v577
      %v700 = vmul.f32 1.0, %v699
      %v701 = vrcp.pop %v578
      %v702 = vmul.f32 1.0, %v701
      %v703 = vrcp.pop %v579
      %v704 = vmul.f32 1.0, %v703
      %v705 = vrcp.pop %v580
      %v706 = vmul.f32 1.0, %v705
      %v707 = vrcp.pop %v581
      %v708 = vmul.f32 1.0, %v707
      %v709 = vrcp.pop %v582
      %v710 = vmul.f32 1.0, %v709
      %v711 = vrcp.pop %v583
      %v712 = vmul.f32 1.0, %v711
      %v713 = vrcp.pop %v584
      %v714 = vmul.f32 1.0, %v713
      %v715 = vrcp.pop %v585
      %v716 = vmul.f32 1.0, %v715
      %v717 = vrcp.pop %v586
      %v718 = vmul.f32 1.0, %v717
      %v719 = vrcp.pop %v587
      %v720 = vmul.f32 1.0, %v719
      %v721 = vrcp.pop %v588
      %v722 = vmul.f32 1.0, %v721
      %v723 = vrcp.pop %v589
      %v724 = vmul.f32 1.0, %v723
      %v725 = vrcp.pop %v590
      %v726 = vmul.f32 1.0, %v725
      %v727 = vrcp.pop %v591
      %v728 = vmul.f32 1.0, %v727
      %v729 = vrcp.pop %v592
      %v730 = vmul.f32 1.0, %v729
      %v731 = vrcp.pop %v593
      %v732 = vmul.f32 1.0, %v731
      %v733 = vrcp.pop %v594
      %v734 = vmul.f32 1.0, %v733
      %v735 = vrcp.pop %v595
      %v736 = vmul.f32 1.0, %v735
      %v737 = vrcp.pop %v596
      %v738 = vmul.f32 1.0, %v737
      %v739 = vrcp.pop %v597
      %v740 = vmul.f32 1.0, %v739
      %v741 = vrcp.pop %v598
      %v742 = vmul.f32 1.0, %v741
      %v743 = vrcp.pop %v599
      %v744 = vmul.f32 1.0, %v743
      %v745 = vrcp.pop %v600
      %v746 = vmul.f32 1.0, %v745
      %v747 = vrcp.pop %v601
      %v748 = vmul.f32 1.0, %v747
      %v749 = vrcp.pop %v602
      %v750 = vmul.f32 1.0, %v749
      %v751 = vrcp.pop %v603
      %v752 = vmul.f32 1.0, %v751
      %v753 = vrcp.pop %v604
      %v754 = vmul.f32 1.0, %v753
      %v755 = vrcp.pop %v605
      %v756 = vmul.f32 1.0, %v755
      %v757 = vrcp.pop %v606
      %v758 = vmul.f32 1.0, %v757
      %v759 = vrcp.pop %v607
      %v760 = vmul.f32 1.0, %v759
      %v761 = vrcp.pop %v608
      %v762 = vmul.f32 1.0, %v761
      %v763 = vrcp.pop %v609
      %v764 = vmul.f32 1.0, %v763
      %v765 = vrcp.pop %v610
      %v766 = vmul.f32 1.0, %v765
      %v767 = vrcp.pop %v611
      %v768 = vmul.f32 1.0, %v767
      %v769 = vrcp.pop %v612
      %v770 = vmul.f32 1.0, %v769
      %v771 = vrcp.pop %v613
      %v772 = vmul.f32 1.0, %v771
      %v773 = vrcp.pop %v614
      %v774 = vmul.f32 1.0, %v773
      %v775 = vrcp.pop %v615
      %v776 = vmul.f32 1.0, %v775
      %v777 = vrcp.pop %v616
      %v778 = vmul.f32 1.0, %v777
      %v779 = vrcp.pop %v617
      %v780 = vmul.f32 1.0, %v779
      %v781 = vrcp.pop %v618
      %v782 = vmul.f32 1.0, %v781
      %v783 = vrcp.pop %v619
      %v784 = vmul.f32 1.0, %v783
      %v785 = vrcp.pop %v620
      %v786 = vmul.f32 1.0, %v785
      %v787 = vrcp.pop %v621
      %v788 = vmul.f32 1.0, %v787
      %v789 = vrcp.pop %v622
      %v790 = vmul.f32 1.0, %v789
      %v791 = vrcp.pop %v623
      %v792 = vmul.f32 1.0, %v791
      %v793 = vrcp.pop %v624
      %v794 = vmul.f32 1.0, %v793
      %v795 = vrcp.pop %v625
      %v796 = vmul.f32 1.0, %v795
      %v797 = vrcp.pop %v626
      %v798 = vmul.f32 1.0, %v797
      %v799 = vrcp.pop %v627
      %v800 = vmul.f32 1.0, %v799
      %v801 = vrcp.pop %v628
      %v802 = vmul.f32 1.0, %v801
      %v803 = vrcp.pop %v629
      %v804 = vmul.f32 1.0, %v803
      %v805 = vrcp.pop %v630
      %v806 = vmul.f32 1.0, %v805
      %v807 = vrcp.pop %v631
      %v808 = vmul.f32 1.0, %v807
      %v809 = vrcp.pop %v632
      %v810 = vmul.f32 1.0, %v809
      %v811 = vrcp.pop %v633
      %v812 = vmul.f32 1.0, %v811
      %v813 = vrcp.pop %v634
      %v814 = vmul.f32 1.0, %v813
      %v815 = vrcp.pop %v635
      %v816 = vmul.f32 1.0, %v815
      %v817 = vrcp.pop %v636
      %v818 = vmul.f32 1.0, %v817
      %v819 = vrcp.pop %v637
      %v820 = vmul.f32 1.0, %v819
      %v821 = vrcp.pop %v638
      %v822 = vmul.f32 1.0, %v821
      %v823 = vrcp.pop %v639
      %v824 = vmul.f32 1.0, %v823
      %v825 = vrcp.pop %v640
      %v826 = vmul.f32 1.0, %v825
      %v827 = vrcp.pop %v641
      %v828 = vmul.f32 1.0, %v827
      %v829 = vrcp.pop %v642
      %v830 = vmul.f32 1.0, %v829
      %v831 = vrcp.pop %v643
      %v832 = vmul.f32 1.0, %v831
      %v833 = vrcp.pop %v644
      %v834 = vmul.f32 1.0, %v833
      %v835 = vrcp.pop %v645
      %v836 = vmul.f32 1.0, %v835
      %v837 = vrcp.pop %v646
      %v838 = vmul.f32 1.0, %v837
      %v839 = vrcp.pop %v647
      %v840 = vmul.f32 1.0, %v839
      %v841 = vrcp.pop %v648
      %v842 = vmul.f32 1.0, %v841
      %v843 = vrcp.pop %v649
      %v844 = vmul.f32 1.0, %v843
      %v845 = vrcp.pop %v650
      %v846 = vmul.f32 1.0, %v845
      %v847 = vrcp.pop %v651
      %v848 = vmul.f32 1.0, %v847
      %v849 = vrcp.pop %v652
      %v850 = vmul.f32 1.0, %v849
      %v851 = vrcp.pop %v653
      %v852 = vmul.f32 1.0, %v851
      %v853 = vrcp.pop %v654
      %v854 = vmul.f32 1.0, %v853
      %v855 = vrcp.pop %v655
      %v856 = vmul.f32 1.0, %v855
      %v857 = vrcp.pop %v656
      %v858 = vmul.f32 1.0, %v857
      %v859 = vrcp.pop %v657
      %v860 = vmul.f32 1.0, %v859
      %v861 = vrcp.pop %v658
      %v862 = vmul.f32 1.0, %v861
      %v863 = vld [vmem:[%s139] sm:$0xff]
      %v864 = vld [vmem:[%s139 + $0x8] sm:$0xff]
      %v865 = vld [vmem:[%s139 + $0x10] sm:$0xff]
      %v866 = vld [vmem:[%s139 + $0x18] sm:$0xff]
      %v867 = vld [vmem:[%s139 + $0x20] sm:$0xff]
      %v868 = vld [vmem:[%s139 + $0x28] sm:$0xff]
      %v869 = vld [vmem:[%s139 + $0x30] sm:$0xff]
      %v870 = vld [vmem:[%s139 + $0x38] sm:$0xff]
      %v871 = vld [vmem:[%s139 + $0x40] sm:$0xff]
      %v872 = vld [vmem:[%s139 + $0x48] sm:$0xff]
      %v873 = vld [vmem:[%s139 + $0x50] sm:$0xff]
      %v874 = vld [vmem:[%s139 + $0x58] sm:$0xff]
      %v875 = vld [vmem:[%s139 + $0x60] sm:$0xff]
      %v876 = vld [vmem:[%s139 + $0x68] sm:$0xff]
      %v877 = vld [vmem:[%s139 + $0x70] sm:$0xff]
      %v878 = vld [vmem:[%s139 + $0x78] sm:$0xff]
      %v879 = vld [vmem:[%s139 + $0x80] sm:$0xff]
      %v880 = vld [vmem:[%s139 + $0x88] sm:$0xff]
      %v881 = vld [vmem:[%s139 + $0x90] sm:$0xff]
      %v882 = vld [vmem:[%s139 + $0x98] sm:$0xff]
      %v883 = vld [vmem:[%s139 + $0xa0] sm:$0xff]
      %v884 = vld [vmem:[%s139 + $0xa8] sm:$0xff]
      %v885 = vld [vmem:[%s139 + $0xb0] sm:$0xff]
      %v886 = vld [vmem:[%s139 + $0xb8] sm:$0xff]
      %v887 = vld [vmem:[%s139 + $0xc0] sm:$0xff]
      %v888 = vld [vmem:[%s139 + $0xc8] sm:$0xff]
      %v889 = vld [vmem:[%s139 + $0xd0] sm:$0xff]
      %v890 = vld [vmem:[%s139 + $0xd8] sm:$0xff]
      %v891 = vld [vmem:[%s139 + $0xe0] sm:$0xff]
      %v892 = vld [vmem:[%s139 + $0xe8] sm:$0xff]
      %v893 = vld [vmem:[%s139 + $0xf0] sm:$0xff]
      %v894 = vld [vmem:[%s139 + $0xf8] sm:$0xff]
      %v895 = vld [vmem:[%s139 + $0x100] sm:$0xff]
      %v896 = vld [vmem:[%s139 + $0x108] sm:$0xff]
      %v897 = vld [vmem:[%s139 + $0x110] sm:$0xff]
      %v898 = vld [vmem:[%s139 + $0x118] sm:$0xff]
      %v899 = vld [vmem:[%s139 + $0x120] sm:$0xff]
      %v900 = vld [vmem:[%s139 + $0x128] sm:$0xff]
      %v901 = vld [vmem:[%s139 + $0x130] sm:$0xff]
      %v902 = vld [vmem:[%s139 + $0x138] sm:$0xff]
      %v903 = vld [vmem:[%s139 + $0x140] sm:$0xff]
      %v904 = vld [vmem:[%s139 + $0x148] sm:$0xff]
      %v905 = vld [vmem:[%s139 + $0x150] sm:$0xff]
      %v906 = vld [vmem:[%s139 + $0x158] sm:$0xff]
      %v907 = vld [vmem:[%s139 + $0x160] sm:$0xff]
      %v908 = vld [vmem:[%s139 + $0x168] sm:$0xff]
      %v909 = vld [vmem:[%s139 + $0x170] sm:$0xff]
      %v910 = vld [vmem:[%s139 + $0x178] sm:$0xff]
      %v911 = vld [vmem:[%s139 + $0x180] sm:$0xff]
      %v912 = vld [vmem:[%s139 + $0x188] sm:$0xff]
      %v913 = vld [vmem:[%s139 + $0x190] sm:$0xff]
      %v914 = vld [vmem:[%s139 + $0x198] sm:$0xff]
      %v915 = vld [vmem:[%s139 + $0x1a0] sm:$0xff]
      %v916 = vld [vmem:[%s139 + $0x1a8] sm:$0xff]
      %v917 = vld [vmem:[%s139 + $0x1b0] sm:$0xff]
      %v918 = vld [vmem:[%s139 + $0x1b8] sm:$0xff]
      %v919 = vld [vmem:[%s139 + $0x1c0] sm:$0xff]
      %v920 = vld [vmem:[%s139 + $0x1c8] sm:$0xff]
      %v921 = vld [vmem:[%s139 + $0x1d0] sm:$0xff]
      %v922 = vld [vmem:[%s139 + $0x1d8] sm:$0xff]
      %v923 = vld [vmem:[%s139 + $0x1e0] sm:$0xff]
      %v924 = vld [vmem:[%s139 + $0x1e8] sm:$0xff]
      %v925 = vld [vmem:[%s139 + $0x1f0] sm:$0xff]
      %v926 = vld [vmem:[%s139 + $0x1f8] sm:$0xff]
      %v927 = vld [vmem:[%s139 + $0x200] sm:$0xff]
      %v928 = vld [vmem:[%s139 + $0x208] sm:$0xff]
      %v929 = vld [vmem:[%s139 + $0x210] sm:$0xff]
      %v930 = vld [vmem:[%s139 + $0x218] sm:$0xff]
      %v931 = vld [vmem:[%s139 + $0x220] sm:$0xff]
      %v932 = vld [vmem:[%s139 + $0x228] sm:$0xff]
      %v933 = vld [vmem:[%s139 + $0x230] sm:$0xff]
      %v934 = vld [vmem:[%s139 + $0x238] sm:$0xff]
      %v935 = vld [vmem:[%s139 + $0x240] sm:$0xff]
      %v936 = vld [vmem:[%s139 + $0x248] sm:$0xff]
      %v937 = vld [vmem:[%s139 + $0x250] sm:$0xff]
      %v938 = vld [vmem:[%s139 + $0x258] sm:$0xff]
      %v939 = vld [vmem:[%s139 + $0x260] sm:$0xff]
      %v940 = vld [vmem:[%s139 + $0x268] sm:$0xff]
      %v941 = vld [vmem:[%s139 + $0x270] sm:$0xff]
      %v942 = vld [vmem:[%s139 + $0x278] sm:$0xff]
      %v943 = vld [vmem:[%s139 + $0x280] sm:$0xff]
      %v944 = vld [vmem:[%s139 + $0x288] sm:$0xff]
      %v945 = vld [vmem:[%s139 + $0x290] sm:$0xff]
      %v946 = vld [vmem:[%s139 + $0x298] sm:$0xff]
      %v947 = vld [vmem:[%s139 + $0x2a0] sm:$0xff]
      %v948 = vld [vmem:[%s139 + $0x2a8] sm:$0xff]
      %v949 = vld [vmem:[%s139 + $0x2b0] sm:$0xff]
      %v950 = vld [vmem:[%s139 + $0x2b8] sm:$0xff]
      %v951 = vld [vmem:[%s139 + $0x2c0] sm:$0xff]
      %v952 = vld [vmem:[%s139 + $0x2c8] sm:$0xff]
      %v953 = vld [vmem:[%s139 + $0x2d0] sm:$0xff]
      %v954 = vld [vmem:[%s139 + $0x2d8] sm:$0xff]
      %v955 = vld [vmem:[%s139 + $0x2e0] sm:$0xff]
      %v956 = vld [vmem:[%s139 + $0x2e8] sm:$0xff]
      %v957 = vld [vmem:[%s139 + $0x2f0] sm:$0xff]
      %v958 = vld [vmem:[%s139 + $0x2f8] sm:$0xff]
      %v959 = vld [vmem:[%s139 + $0x300] sm:$0xff]
      %v960 = vld [vmem:[%s139 + $0x308] sm:$0xff]
      %v961 = vld [vmem:[%s139 + $0x310] sm:$0xff]
      %v962 = vld [vmem:[%s139 + $0x318] sm:$0xff]
      %v963 = vld [vmem:[%s139 + $0x320] sm:$0xff]
      %v964 = vld [vmem:[%s139 + $0x328] sm:$0xff]
      %966 = vset.pattern.permute.xlu0 0
      %967 = vperm.xlu0 %966, %v660
      %v968 = vpop.permute.xlu0 %967
      %971 = vset.pattern.permute.xlu0 0
      %972 = vperm.xlu0 %971, %v662
      %v973 = vpop.permute.xlu0 %972
      %976 = vset.pattern.permute.xlu0 0
      %977 = vperm.xlu0 %976, %v664
      %v978 = vpop.permute.xlu0 %977
      %981 = vset.pattern.permute.xlu0 0
      %982 = vperm.xlu0 %981, %v666
      %v983 = vpop.permute.xlu0 %982
      %986 = vset.pattern.permute.xlu0 0
      %987 = vperm.xlu0 %986, %v668
      %v988 = vpop.permute.xlu0 %987
      %991 = vset.pattern.permute.xlu0 0
      %992 = vperm.xlu0 %991, %v670
      %v993 = vpop.permute.xlu0 %992
      %996 = vset.pattern.permute.xlu0 0
      %997 = vperm.xlu0 %996, %v672
      %v998 = vpop.permute.xlu0 %997
      %1001 = vset.pattern.permute.xlu0 0
      %1002 = vperm.xlu0 %1001, %v674
      %v1003 = vpop.permute.xlu0 %1002
      %1006 = vset.pattern.permute.xlu0 0
      %1007 = vperm.xlu0 %1006, %v676
      %v1008 = vpop.permute.xlu0 %1007
      %1011 = vset.pattern.permute.xlu0 0
      %1012 = vperm.xlu0 %1011, %v678
      %v1013 = vpop.permute.xlu0 %1012
      %1016 = vset.pattern.permute.xlu0 0
      %1017 = vperm.xlu0 %1016, %v680
      %v1018 = vpop.permute.xlu0 %1017
      %1021 = vset.pattern.permute.xlu0 0
      %1022 = vperm.xlu0 %1021, %v682
      %v1023 = vpop.permute.xlu0 %1022
      %1026 = vset.pattern.permute.xlu0 0
      %1027 = vperm.xlu0 %1026, %v684
      %v1028 = vpop.permute.xlu0 %1027
      %1031 = vset.pattern.permute.xlu0 0
      %1032 = vperm.xlu0 %1031, %v686
      %v1033 = vpop.permute.xlu0 %1032
      %1036 = vset.pattern.permute.xlu0 0
      %1037 = vperm.xlu0 %1036, %v688
      %v1038 = vpop.permute.xlu0 %1037
      %1041 = vset.pattern.permute.xlu0 0
      %1042 = vperm.xlu0 %1041, %v690
      %v1043 = vpop.permute.xlu0 %1042
      %1046 = vset.pattern.permute.xlu0 0
      %1047 = vperm.xlu0 %1046, %v692
      %v1048 = vpop.permute.xlu0 %1047
      %1051 = vset.pattern.permute.xlu0 0
      %1052 = vperm.xlu0 %1051, %v694
      %v1053 = vpop.permute.xlu0 %1052
      %1056 = vset.pattern.permute.xlu0 0
      %1057 = vperm.xlu0 %1056, %v696
      %v1058 = vpop.permute.xlu0 %1057
      %1061 = vset.pattern.permute.xlu0 0
      %1062 = vperm.xlu0 %1061, %v698
      %v1063 = vpop.permute.xlu0 %1062
      %1066 = vset.pattern.permute.xlu0 0
      %1067 = vperm.xlu0 %1066, %v700
      %v1068 = vpop.permute.xlu0 %1067
      %1071 = vset.pattern.permute.xlu0 0
      %1072 = vperm.xlu0 %1071, %v702
      %v1073 = vpop.permute.xlu0 %1072
      %1076 = vset.pattern.permute.xlu0 0
      %1077 = vperm.xlu0 %1076, %v704
      %v1078 = vpop.permute.xlu0 %1077
      %1081 = vset.pattern.permute.xlu0 0
      %1082 = vperm.xlu0 %1081, %v706
      %v1083 = vpop.permute.xlu0 %1082
      %1086 = vset.pattern.permute.xlu0 0
      %1087 = vperm.xlu0 %1086, %v708
      %v1088 = vpop.permute.xlu0 %1087
      %1091 = vset.pattern.permute.xlu0 0
      %1092 = vperm.xlu0 %1091, %v710
      %v1093 = vpop.permute.xlu0 %1092
      %1096 = vset.pattern.permute.xlu0 0
      %1097 = vperm.xlu0 %1096, %v712
      %v1098 = vpop.permute.xlu0 %1097
      %1101 = vset.pattern.permute.xlu0 0
      %1102 = vperm.xlu0 %1101, %v714
      %v1103 = vpop.permute.xlu0 %1102
      %1106 = vset.pattern.permute.xlu0 0
      %1107 = vperm.xlu0 %1106, %v716
      %v1108 = vpop.permute.xlu0 %1107
      %1111 = vset.pattern.permute.xlu0 0
      %1112 = vperm.xlu0 %1111, %v718
      %v1113 = vpop.permute.xlu0 %1112
      %1116 = vset.pattern.permute.xlu0 0
      %1117 = vperm.xlu0 %1116, %v720
      %v1118 = vpop.permute.xlu0 %1117
      %1121 = vset.pattern.permute.xlu0 0
      %1122 = vperm.xlu0 %1121, %v722
      %v1123 = vpop.permute.xlu0 %1122
      %1126 = vset.pattern.permute.xlu0 0
      %1127 = vperm.xlu0 %1126, %v724
      %v1128 = vpop.permute.xlu0 %1127
      %1131 = vset.pattern.permute.xlu0 0
      %1132 = vperm.xlu0 %1131, %v726
      %v1133 = vpop.permute.xlu0 %1132
      %1136 = vset.pattern.permute.xlu0 0
      %1137 = vperm.xlu0 %1136, %v728
      %v1138 = vpop.permute.xlu0 %1137
      %1141 = vset.pattern.permute.xlu0 0
      %1142 = vperm.xlu0 %1141, %v730
      %v1143 = vpop.permute.xlu0 %1142
      %1146 = vset.pattern.permute.xlu0 0
      %1147 = vperm.xlu0 %1146, %v732
      %v1148 = vpop.permute.xlu0 %1147
      %1151 = vset.pattern.permute.xlu0 0
      %1152 = vperm.xlu0 %1151, %v734
      %v1153 = vpop.permute.xlu0 %1152
      %1156 = vset.pattern.permute.xlu0 0
      %1157 = vperm.xlu0 %1156, %v736
      %v1158 = vpop.permute.xlu0 %1157
      %1161 = vset.pattern.permute.xlu0 0
      %1162 = vperm.xlu0 %1161, %v738
      %v1163 = vpop.permute.xlu0 %1162
      %1166 = vset.pattern.permute.xlu0 0
      %1167 = vperm.xlu0 %1166, %v740
      %v1168 = vpop.permute.xlu0 %1167
      %1171 = vset.pattern.permute.xlu0 0
      %1172 = vperm.xlu0 %1171, %v742
      %v1173 = vpop.permute.xlu0 %1172
      %1176 = vset.pattern.permute.xlu0 0
      %1177 = vperm.xlu0 %1176, %v744
      %v1178 = vpop.permute.xlu0 %1177
      %1181 = vset.pattern.permute.xlu0 0
      %1182 = vperm.xlu0 %1181, %v746
      %v1183 = vpop.permute.xlu0 %1182
      %1186 = vset.pattern.permute.xlu0 0
      %1187 = vperm.xlu0 %1186, %v748
      %v1188 = vpop.permute.xlu0 %1187
      %1191 = vset.pattern.permute.xlu0 0
      %1192 = vperm.xlu0 %1191, %v750
      %v1193 = vpop.permute.xlu0 %1192
      %1196 = vset.pattern.permute.xlu0 0
      %1197 = vperm.xlu0 %1196, %v752
      %v1198 = vpop.permute.xlu0 %1197
      %1201 = vset.pattern.permute.xlu0 0
      %1202 = vperm.xlu0 %1201, %v754
      %v1203 = vpop.permute.xlu0 %1202
      %1206 = vset.pattern.permute.xlu0 0
      %1207 = vperm.xlu0 %1206, %v756
      %v1208 = vpop.permute.xlu0 %1207
      %1211 = vset.pattern.permute.xlu0 0
      %1212 = vperm.xlu0 %1211, %v758
      %v1213 = vpop.permute.xlu0 %1212
      %1216 = vset.pattern.permute.xlu0 0
      %1217 = vperm.xlu0 %1216, %v760
      %v1218 = vpop.permute.xlu0 %1217
      %1221 = vset.pattern.permute.xlu0 0
      %1222 = vperm.xlu0 %1221, %v762
      %v1223 = vpop.permute.xlu0 %1222
      %1226 = vset.pattern.permute.xlu0 0
      %1227 = vperm.xlu0 %1226, %v764
      %v1228 = vpop.permute.xlu0 %1227
      %1231 = vset.pattern.permute.xlu0 0
      %1232 = vperm.xlu0 %1231, %v766
      %v1233 = vpop.permute.xlu0 %1232
      %1236 = vset.pattern.permute.xlu0 0
      %1237 = vperm.xlu0 %1236, %v768
      %v1238 = vpop.permute.xlu0 %1237
      %1241 = vset.pattern.permute.xlu0 0
      %1242 = vperm.xlu0 %1241, %v770
      %v1243 = vpop.permute.xlu0 %1242
      %1246 = vset.pattern.permute.xlu0 0
      %1247 = vperm.xlu0 %1246, %v772
      %v1248 = vpop.permute.xlu0 %1247
      %1251 = vset.pattern.permute.xlu0 0
      %1252 = vperm.xlu0 %1251, %v774
      %v1253 = vpop.permute.xlu0 %1252
      %1256 = vset.pattern.permute.xlu0 0
      %1257 = vperm.xlu0 %1256, %v776
      %v1258 = vpop.permute.xlu0 %1257
      %1261 = vset.pattern.permute.xlu0 0
      %1262 = vperm.xlu0 %1261, %v778
      %v1263 = vpop.permute.xlu0 %1262
      %1266 = vset.pattern.permute.xlu0 0
      %1267 = vperm.xlu0 %1266, %v780
      %v1268 = vpop.permute.xlu0 %1267
      %1271 = vset.pattern.permute.xlu0 0
      %1272 = vperm.xlu0 %1271, %v782
      %v1273 = vpop.permute.xlu0 %1272
      %1276 = vset.pattern.permute.xlu0 0
      %1277 = vperm.xlu0 %1276, %v784
      %v1278 = vpop.permute.xlu0 %1277
      %1281 = vset.pattern.permute.xlu0 0
      %1282 = vperm.xlu0 %1281, %v786
      %v1283 = vpop.permute.xlu0 %1282
      %1286 = vset.pattern.permute.xlu0 0
      %1287 = vperm.xlu0 %1286, %v788
      %v1288 = vpop.permute.xlu0 %1287
      %1291 = vset.pattern.permute.xlu0 0
      %1292 = vperm.xlu0 %1291, %v790
      %v1293 = vpop.permute.xlu0 %1292
      %1296 = vset.pattern.permute.xlu0 0
      %1297 = vperm.xlu0 %1296, %v792
      %v1298 = vpop.permute.xlu0 %1297
      %1301 = vset.pattern.permute.xlu0 0
      %1302 = vperm.xlu0 %1301, %v794
      %v1303 = vpop.permute.xlu0 %1302
      %1306 = vset.pattern.permute.xlu0 0
      %1307 = vperm.xlu0 %1306, %v796
      %v1308 = vpop.permute.xlu0 %1307
      %1311 = vset.pattern.permute.xlu0 0
      %1312 = vperm.xlu0 %1311, %v798
      %v1313 = vpop.permute.xlu0 %1312
      %1316 = vset.pattern.permute.xlu0 0
      %1317 = vperm.xlu0 %1316, %v800
      %v1318 = vpop.permute.xlu0 %1317
      %1321 = vset.pattern.permute.xlu0 0
      %1322 = vperm.xlu0 %1321, %v802
      %v1323 = vpop.permute.xlu0 %1322
      %1326 = vset.pattern.permute.xlu0 0
      %1327 = vperm.xlu0 %1326, %v804
      %v1328 = vpop.permute.xlu0 %1327
      %1331 = vset.pattern.permute.xlu0 0
      %1332 = vperm.xlu0 %1331, %v806
      %v1333 = vpop.permute.xlu0 %1332
      %1336 = vset.pattern.permute.xlu0 0
      %1337 = vperm.xlu0 %1336, %v808
      %v1338 = vpop.permute.xlu0 %1337
      %1341 = vset.pattern.permute.xlu0 0
      %1342 = vperm.xlu0 %1341, %v810
      %v1343 = vpop.permute.xlu0 %1342
      %1346 = vset.pattern.permute.xlu0 0
      %1347 = vperm.xlu0 %1346, %v812
      %v1348 = vpop.permute.xlu0 %1347
      %1351 = vset.pattern.permute.xlu0 0
      %1352 = vperm.xlu0 %1351, %v814
      %v1353 = vpop.permute.xlu0 %1352
      %1356 = vset.pattern.permute.xlu0 0
      %1357 = vperm.xlu0 %1356, %v816
      %v1358 = vpop.permute.xlu0 %1357
      %1361 = vset.pattern.permute.xlu0 0
      %1362 = vperm.xlu0 %1361, %v818
      %v1363 = vpop.permute.xlu0 %1362
      %1366 = vset.pattern.permute.xlu0 0
      %1367 = vperm.xlu0 %1366, %v820
      %v1368 = vpop.permute.xlu0 %1367
      %1371 = vset.pattern.permute.xlu0 0
      %1372 = vperm.xlu0 %1371, %v822
      %v1373 = vpop.permute.xlu0 %1372
      %1376 = vset.pattern.permute.xlu0 0
      %1377 = vperm.xlu0 %1376, %v824
      %v1378 = vpop.permute.xlu0 %1377
      %1381 = vset.pattern.permute.xlu0 0
      %1382 = vperm.xlu0 %1381, %v826
      %v1383 = vpop.permute.xlu0 %1382
      %1386 = vset.pattern.permute.xlu0 0
      %1387 = vperm.xlu0 %1386, %v828
      %v1388 = vpop.permute.xlu0 %1387
      %1391 = vset.pattern.permute.xlu0 0
      %1392 = vperm.xlu0 %1391, %v830
      %v1393 = vpop.permute.xlu0 %1392
      %1396 = vset.pattern.permute.xlu0 0
      %1397 = vperm.xlu0 %1396, %v832
      %v1398 = vpop.permute.xlu0 %1397
      %1401 = vset.pattern.permute.xlu0 0
      %1402 = vperm.xlu0 %1401, %v834
      %v1403 = vpop.permute.xlu0 %1402
      %1406 = vset.pattern.permute.xlu0 0
      %1407 = vperm.xlu0 %1406, %v836
      %v1408 = vpop.permute.xlu0 %1407
      %1411 = vset.pattern.permute.xlu0 0
      %1412 = vperm.xlu0 %1411, %v838
      %v1413 = vpop.permute.xlu0 %1412
      %1416 = vset.pattern.permute.xlu0 0
      %1417 = vperm.xlu0 %1416, %v840
      %v1418 = vpop.permute.xlu0 %1417
      %1421 = vset.pattern.permute.xlu0 0
      %1422 = vperm.xlu0 %1421, %v842
      %v1423 = vpop.permute.xlu0 %1422
      %1426 = vset.pattern.permute.xlu0 0
      %1427 = vperm.xlu0 %1426, %v844
      %v1428 = vpop.permute.xlu0 %1427
      %1431 = vset.pattern.permute.xlu0 0
      %1432 = vperm.xlu0 %1431, %v846
      %v1433 = vpop.permute.xlu0 %1432
      %1436 = vset.pattern.permute.xlu0 0
      %1437 = vperm.xlu0 %1436, %v848
      %v1438 = vpop.permute.xlu0 %1437
      %1441 = vset.pattern.permute.xlu0 0
      %1442 = vperm.xlu0 %1441, %v850
      %v1443 = vpop.permute.xlu0 %1442
      %1446 = vset.pattern.permute.xlu0 0
      %1447 = vperm.xlu0 %1446, %v852
      %v1448 = vpop.permute.xlu0 %1447
      %1451 = vset.pattern.permute.xlu0 0
      %1452 = vperm.xlu0 %1451, %v854
      %v1453 = vpop.permute.xlu0 %1452
      %1456 = vset.pattern.permute.xlu0 0
      %1457 = vperm.xlu0 %1456, %v856
      %v1458 = vpop.permute.xlu0 %1457
      %1461 = vset.pattern.permute.xlu0 0
      %1462 = vperm.xlu0 %1461, %v858
      %v1463 = vpop.permute.xlu0 %1462
      %1466 = vset.pattern.permute.xlu0 0
      %1467 = vperm.xlu0 %1466, %v860
      %v1468 = vpop.permute.xlu0 %1467
      %1471 = vset.pattern.permute.xlu0 0
      %1472 = vperm.xlu0 %1471, %v862
      %v1473 = vpop.permute.xlu0 %1472
      %v1475 = vmul.f32 %v968, %v863
      %v1476 = vmul.f32 %v973, %v864
      %v1477 = vmul.f32 %v978, %v865
      %v1478 = vmul.f32 %v983, %v866
      %v1479 = vmul.f32 %v988, %v867
      %v1480 = vmul.f32 %v993, %v868
      %v1481 = vmul.f32 %v998, %v869
      %v1482 = vmul.f32 %v1003, %v870
      %v1483 = vmul.f32 %v1008, %v871
      %v1484 = vmul.f32 %v1013, %v872
      %v1485 = vmul.f32 %v1018, %v873
      %v1486 = vmul.f32 %v1023, %v874
      %v1487 = vmul.f32 %v1028, %v875
      %v1488 = vmul.f32 %v1033, %v876
      %v1489 = vmul.f32 %v1038, %v877
      %v1490 = vmul.f32 %v1043, %v878
      %v1491 = vmul.f32 %v1048, %v879
      %v1492 = vmul.f32 %v1053, %v880
      %v1493 = vmul.f32 %v1058, %v881
      %v1494 = vmul.f32 %v1063, %v882
      %v1495 = vmul.f32 %v1068, %v883
      %v1496 = vmul.f32 %v1073, %v884
      %v1497 = vmul.f32 %v1078, %v885
      %v1498 = vmul.f32 %v1083, %v886
      %v1499 = vmul.f32 %v1088, %v887
      %v1500 = vmul.f32 %v1093, %v888
      %v1501 = vmul.f32 %v1098, %v889
      %v1502 = vmul.f32 %v1103, %v890
      %v1503 = vmul.f32 %v1108, %v891
      %v1504 = vmul.f32 %v1113, %v892
      %v1505 = vmul.f32 %v1118, %v893
      %v1506 = vmul.f32 %v1123, %v894
      %v1507 = vmul.f32 %v1128, %v895
      %v1508 = vmul.f32 %v1133, %v896
      %v1509 = vmul.f32 %v1138, %v897
      %v1510 = vmul.f32 %v1143, %v898
      %v1511 = vmul.f32 %v1148, %v899
      %v1512 = vmul.f32 %v1153, %v900
      %v1513 = vmul.f32 %v1158, %v901
      %v1514 = vmul.f32 %v1163, %v902
      %v1515 = vmul.f32 %v1168, %v903
      %v1516 = vmul.f32 %v1173, %v904
      %v1517 = vmul.f32 %v1178, %v905
      %v1518 = vmul.f32 %v1183, %v906
      %v1519 = vmul.f32 %v1188, %v907
      %v1520 = vmul.f32 %v1193, %v908
      %v1521 = vmul.f32 %v1198, %v909
      %v1522 = vmul.f32 %v1203, %v910
      %v1523 = vmul.f32 %v1208, %v911
      %v1524 = vmul.f32 %v1213, %v912
      %v1525 = vmul.f32 %v1218, %v913
      %v1526 = vmul.f32 %v1223, %v914
      %v1527 = vmul.f32 %v1228, %v915
      %v1528 = vmul.f32 %v1233, %v916
      %v1529 = vmul.f32 %v1238, %v917
      %v1530 = vmul.f32 %v1243, %v918
      %v1531 = vmul.f32 %v1248, %v919
      %v1532 = vmul.f32 %v1253, %v920
      %v1533 = vmul.f32 %v1258, %v921
      %v1534 = vmul.f32 %v1263, %v922
      %v1535 = vmul.f32 %v1268, %v923
      %v1536 = vmul.f32 %v1273, %v924
      %v1537 = vmul.f32 %v1278, %v925
      %v1538 = vmul.f32 %v1283, %v926
      %v1539 = vmul.f32 %v1288, %v927
      %v1540 = vmul.f32 %v1293, %v928
      %v1541 = vmul.f32 %v1298, %v929
      %v1542 = vmul.f32 %v1303, %v930
      %v1543 = vmul.f32 %v1308, %v931
      %v1544 = vmul.f32 %v1313, %v932
      %v1545 = vmul.f32 %v1318, %v933
      %v1546 = vmul.f32 %v1323, %v934
      %v1547 = vmul.f32 %v1328, %v935
      %v1548 = vmul.f32 %v1333, %v936
      %v1549 = vmul.f32 %v1338, %v937
      %v1550 = vmul.f32 %v1343, %v938
      %v1551 = vmul.f32 %v1348, %v939
      %v1552 = vmul.f32 %v1353, %v940
      %v1553 = vmul.f32 %v1358, %v941
      %v1554 = vmul.f32 %v1363, %v942
      %v1555 = vmul.f32 %v1368, %v943
      %v1556 = vmul.f32 %v1373, %v944
      %v1557 = vmul.f32 %v1378, %v945
      %v1558 = vmul.f32 %v1383, %v946
      %v1559 = vmul.f32 %v1388, %v947
      %v1560 = vmul.f32 %v1393, %v948
      %v1561 = vmul.f32 %v1398, %v949
      %v1562 = vmul.f32 %v1403, %v950
      %v1563 = vmul.f32 %v1408, %v951
      %v1564 = vmul.f32 %v1413, %v952
      %v1565 = vmul.f32 %v1418, %v953
      %v1566 = vmul.f32 %v1423, %v954
      %v1567 = vmul.f32 %v1428, %v955
      %v1568 = vmul.f32 %v1433, %v956
      %v1569 = vmul.f32 %v1438, %v957
      %v1570 = vmul.f32 %v1443, %v958
      %v1571 = vmul.f32 %v1448, %v959
      %v1572 = vmul.f32 %v1453, %v960
      %v1573 = vmul.f32 %v1458, %v961
      %v1574 = vmul.f32 %v1463, %v962
      %v1575 = vmul.f32 %v1468, %v963
      %v1576 = vmul.f32 %v1473, %v964
      %vm1577 = vcmask 400384
      %1578 = vst.msk [vmem:[%s145] sm:$0xff] %vm1577, %v1475
      %1579 = vst.msk [vmem:[%s145 + $0x8] sm:$0xff] %vm1577, %v1476
      %1580 = vst.msk [vmem:[%s145 + $0x10] sm:$0xff] %vm1577, %v1477
      %1581 = vst.msk [vmem:[%s145 + $0x18] sm:$0xff] %vm1577, %v1478
      %1582 = vst.msk [vmem:[%s145 + $0x20] sm:$0xff] %vm1577, %v1479
      %1583 = vst.msk [vmem:[%s145 + $0x28] sm:$0xff] %vm1577, %v1480
      %1584 = vst.msk [vmem:[%s145 + $0x30] sm:$0xff] %vm1577, %v1481
      %1585 = vst.msk [vmem:[%s145 + $0x38] sm:$0xff] %vm1577, %v1482
      %1586 = vst.msk [vmem:[%s145 + $0x40] sm:$0xff] %vm1577, %v1483
      %1587 = vst.msk [vmem:[%s145 + $0x48] sm:$0xff] %vm1577, %v1484
      %1588 = vst.msk [vmem:[%s145 + $0x50] sm:$0xff] %vm1577, %v1485
      %1589 = vst.msk [vmem:[%s145 + $0x58] sm:$0xff] %vm1577, %v1486
      %1590 = vst.msk [vmem:[%s145 + $0x60] sm:$0xff] %vm1577, %v1487
      %1591 = vst.msk [vmem:[%s145 + $0x68] sm:$0xff] %vm1577, %v1488
      %1592 = vst.msk [vmem:[%s145 + $0x70] sm:$0xff] %vm1577, %v1489
      %1593 = vst.msk [vmem:[%s145 + $0x78] sm:$0xff] %vm1577, %v1490
      %1594 = vst.msk [vmem:[%s145 + $0x80] sm:$0xff] %vm1577, %v1491
      %1595 = vst.msk [vmem:[%s145 + $0x88] sm:$0xff] %vm1577, %v1492
      %1596 = vst.msk [vmem:[%s145 + $0x90] sm:$0xff] %vm1577, %v1493
      %1597 = vst.msk [vmem:[%s145 + $0x98] sm:$0xff] %vm1577, %v1494
      %1598 = vst.msk [vmem:[%s145 + $0xa0] sm:$0xff] %vm1577, %v1495
      %1599 = vst.msk [vmem:[%s145 + $0xa8] sm:$0xff] %vm1577, %v1496
      %1600 = vst.msk [vmem:[%s145 + $0xb0] sm:$0xff] %vm1577, %v1497
      %1601 = vst.msk [vmem:[%s145 + $0xb8] sm:$0xff] %vm1577, %v1498
      %1602 = vst.msk [vmem:[%s145 + $0xc0] sm:$0xff] %vm1577, %v1499
      %1603 = vst.msk [vmem:[%s145 + $0xc8] sm:$0xff] %vm1577, %v1500
      %1604 = vst.msk [vmem:[%s145 + $0xd0] sm:$0xff] %vm1577, %v1501
      %1605 = vst.msk [vmem:[%s145 + $0xd8] sm:$0xff] %vm1577, %v1502
      %1606 = vst.msk [vmem:[%s145 + $0xe0] sm:$0xff] %vm1577, %v1503
      %1607 = vst.msk [vmem:[%s145 + $0xe8] sm:$0xff] %vm1577, %v1504
      %1608 = vst.msk [vmem:[%s145 + $0xf0] sm:$0xff] %vm1577, %v1505
      %1609 = vst.msk [vmem:[%s145 + $0xf8] sm:$0xff] %vm1577, %v1506
      %1610 = vst.msk [vmem:[%s145 + $0x100] sm:$0xff] %vm1577, %v1507
      %1611 = vst.msk [vmem:[%s145 + $0x108] sm:$0xff] %vm1577, %v1508
      %1612 = vst.msk [vmem:[%s145 + $0x110] sm:$0xff] %vm1577, %v1509
      %1613 = vst.msk [vmem:[%s145 + $0x118] sm:$0xff] %vm1577, %v1510
      %1614 = vst.msk [vmem:[%s145 + $0x120] sm:$0xff] %vm1577, %v1511
      %1615 = vst.msk [vmem:[%s145 + $0x128] sm:$0xff] %vm1577, %v1512
      %1616 = vst.msk [vmem:[%s145 + $0x130] sm:$0xff] %vm1577, %v1513
      %1617 = vst.msk [vmem:[%s145 + $0x138] sm:$0xff] %vm1577, %v1514
      %1618 = vst.msk [vmem:[%s145 + $0x140] sm:$0xff] %vm1577, %v1515
      %1619 = vst.msk [vmem:[%s145 + $0x148] sm:$0xff] %vm1577, %v1516
      %1620 = vst.msk [vmem:[%s145 + $0x150] sm:$0xff] %vm1577, %v1517
      %1621 = vst.msk [vmem:[%s145 + $0x158] sm:$0xff] %vm1577, %v1518
      %1622 = vst.msk [vmem:[%s145 + $0x160] sm:$0xff] %vm1577, %v1519
      %1623 = vst.msk [vmem:[%s145 + $0x168] sm:$0xff] %vm1577, %v1520
      %1624 = vst.msk [vmem:[%s145 + $0x170] sm:$0xff] %vm1577, %v1521
      %1625 = vst.msk [vmem:[%s145 + $0x178] sm:$0xff] %vm1577, %v1522
      %1626 = vst.msk [vmem:[%s145 + $0x180] sm:$0xff] %vm1577, %v1523
      %1627 = vst.msk [vmem:[%s145 + $0x188] sm:$0xff] %vm1577, %v1524
      %1628 = vst.msk [vmem:[%s145 + $0x190] sm:$0xff] %vm1577, %v1525
      %1629 = vst.msk [vmem:[%s145 + $0x198] sm:$0xff] %vm1577, %v1526
      %1630 = vst.msk [vmem:[%s145 + $0x1a0] sm:$0xff] %vm1577, %v1527
      %1631 = vst.msk [vmem:[%s145 + $0x1a8] sm:$0xff] %vm1577, %v1528
      %1632 = vst.msk [vmem:[%s145 + $0x1b0] sm:$0xff] %vm1577, %v1529
      %1633 = vst.msk [vmem:[%s145 + $0x1b8] sm:$0xff] %vm1577, %v1530
      %1634 = vst.msk [vmem:[%s145 + $0x1c0] sm:$0xff] %vm1577, %v1531
      %1635 = vst.msk [vmem:[%s145 + $0x1c8] sm:$0xff] %vm1577, %v1532
      %1636 = vst.msk [vmem:[%s145 + $0x1d0] sm:$0xff] %vm1577, %v1533
      %1637 = vst.msk [vmem:[%s145 + $0x1d8] sm:$0xff] %vm1577, %v1534
      %1638 = vst.msk [vmem:[%s145 + $0x1e0] sm:$0xff] %vm1577, %v1535
      %1639 = vst.msk [vmem:[%s145 + $0x1e8] sm:$0xff] %vm1577, %v1536
      %1640 = vst.msk [vmem:[%s145 + $0x1f0] sm:$0xff] %vm1577, %v1537
      %1641 = vst.msk [vmem:[%s145 + $0x1f8] sm:$0xff] %vm1577, %v1538
      %1642 = vst.msk [vmem:[%s145 + $0x200] sm:$0xff] %vm1577, %v1539
      %1643 = vst.msk [vmem:[%s145 + $0x208] sm:$0xff] %vm1577, %v1540
      %1644 = vst.msk [vmem:[%s145 + $0x210] sm:$0xff] %vm1577, %v1541
      %1645 = vst.msk [vmem:[%s145 + $0x218] sm:$0xff] %vm1577, %v1542
      %1646 = vst.msk [vmem:[%s145 + $0x220] sm:$0xff] %vm1577, %v1543
      %1647 = vst.msk [vmem:[%s145 + $0x228] sm:$0xff] %vm1577, %v1544
      %1648 = vst.msk [vmem:[%s145 + $0x230] sm:$0xff] %vm1577, %v1545
      %1649 = vst.msk [vmem:[%s145 + $0x238] sm:$0xff] %vm1577, %v1546
      %1650 = vst.msk [vmem:[%s145 + $0x240] sm:$0xff] %vm1577, %v1547
      %1651 = vst.msk [vmem:[%s145 + $0x248] sm:$0xff] %vm1577, %v1548
      %1652 = vst.msk [vmem:[%s145 + $0x250] sm:$0xff] %vm1577, %v1549
      %1653 = vst.msk [vmem:[%s145 + $0x258] sm:$0xff] %vm1577, %v1550
      %1654 = vst.msk [vmem:[%s145 + $0x260] sm:$0xff] %vm1577, %v1551
      %1655 = vst.msk [vmem:[%s145 + $0x268] sm:$0xff] %vm1577, %v1552
      %1656 = vst.msk [vmem:[%s145 + $0x270] sm:$0xff] %vm1577, %v1553
      %1657 = vst.msk [vmem:[%s145 + $0x278] sm:$0xff] %vm1577, %v1554
      %1658 = vst.msk [vmem:[%s145 + $0x280] sm:$0xff] %vm1577, %v1555
      %1659 = vst.msk [vmem:[%s145 + $0x288] sm:$0xff] %vm1577, %v1556
      %1660 = vst.msk [vmem:[%s145 + $0x290] sm:$0xff] %vm1577, %v1557
      %1661 = vst.msk [vmem:[%s145 + $0x298] sm:$0xff] %vm1577, %v1558
      %1662 = vst.msk [vmem:[%s145 + $0x2a0] sm:$0xff] %vm1577, %v1559
      %1663 = vst.msk [vmem:[%s145 + $0x2a8] sm:$0xff] %vm1577, %v1560
      %1664 = vst.msk [vmem:[%s145 + $0x2b0] sm:$0xff] %vm1577, %v1561
      %1665 = vst.msk [vmem:[%s145 + $0x2b8] sm:$0xff] %vm1577, %v1562
      %1666 = vst.msk [vmem:[%s145 + $0x2c0] sm:$0xff] %vm1577, %v1563
      %1667 = vst.msk [vmem:[%s145 + $0x2c8] sm:$0xff] %vm1577, %v1564
      %1668 = vst.msk [vmem:[%s145 + $0x2d0] sm:$0xff] %vm1577, %v1565
      %1669 = vst.msk [vmem:[%s145 + $0x2d8] sm:$0xff] %vm1577, %v1566
      %1670 = vst.msk [vmem:[%s145 + $0x2e0] sm:$0xff] %vm1577, %v1567
      %1671 = vst.msk [vmem:[%s145 + $0x2e8] sm:$0xff] %vm1577, %v1568
      %1672 = vst.msk [vmem:[%s145 + $0x2f0] sm:$0xff] %vm1577, %v1569
      %1673 = vst.msk [vmem:[%s145 + $0x2f8] sm:$0xff] %vm1577, %v1570
      %1674 = vst.msk [vmem:[%s145 + $0x300] sm:$0xff] %vm1577, %v1571
      %1675 = vst.msk [vmem:[%s145 + $0x308] sm:$0xff] %vm1577, %v1572
      %1676 = vst.msk [vmem:[%s145 + $0x310] sm:$0xff] %vm1577, %v1573
      %1677 = vst.msk [vmem:[%s145 + $0x318] sm:$0xff] %vm1577, %v1574
      %1678 = vst.msk [vmem:[%s145 + $0x320] sm:$0xff] %vm1577, %v1575
      %1679 = vst.msk [vmem:[%s145 + $0x328] sm:$0xff] %vm1577, %v1576
      %s1680 = smul.u32 102, %s13
      %p1681 = scmp.lt.s32.totalorder %s1680, 203
      %s1682 = scalar_select %p1681, %s1680, 203
      %s1683 = smul.addr %s1682, 8
      %s1684 = scalar_lea.vmem %s2, %s1683
      // Predicated region
      $region29: #{tpu_custom_call.1} parent=27 // pred_check
        %p1685 = pneg %p78
      $region30: #{tpu_custom_call.1} parent=27 // pred_check_branch
        %1687 = sbr.rel (%p1685) target = $region32
      $region31: #{tpu_custom_call.1} parent=27 // pred_region
        %s1688 = smul.u32 102, %s13
      $region32: #{tpu_custom_call.1} parent=27 // pred_fallthru
        _
    $region28: #{tpu_custom_call.1} parent=5 // pred_fallthru
      _
    %p1689 = scmp.le.s32.totalorder 2, %s8
    // Predicated region
    $region33: #{tpu_custom_call.1} parent=5 // pred_check
      %p1690 = pneg %p1689
    $region34: #{tpu_custom_call.1} parent=5 // pred_check_branch
      %1692 = sbr.rel (%p1690) target = $region36
    $region35: #{tpu_custom_call.1} parent=5 // pred_region
      %s1693 = ssub.s32 %s8, 2
      // Predicated region
      $region37: #{tpu_custom_call.1} parent=35 // pred_check
        %p1694 = pneg %p84
      $region38: #{tpu_custom_call.1} parent=35 // pred_check_branch
        %1696 = sbr.rel (%p1694) target = $region40
      $region39: #{tpu_custom_call.1} parent=35 // pred_region
        %s1697 = smul.u32 102, %s14
        %p1698 = scmp.lt.s32.totalorder %s1697, 203
        %s1699 = scalar_select %p1698, %s1697, 203
        %s1700 = smul.addr %s1699, 8
        %s1701 = scalar_lea.vmem %s2, %s1700
      $region40: #{tpu_custom_call.1} parent=35 // pred_fallthru
        _
    $region36: #{tpu_custom_call.1} parent=5 // pred_fallthru
      _
  $region6: #{tpu_custom_call.1} parent=0 // loop_footer
    %s12 = sadd.s32 1, %s8
  $region7: #{tpu_custom_call.1} parent=0 // loop_footer_branch
    %7 = sbr.rel target = $region3
  $region8: #{tpu_custom_call.1} parent=0 // loop_exit
    _

</llo_original>
